<compile_context>
chip_gen: v6e
topology: v6e:2x2x1
jax: 0.10.0
libtpu: 0.0.40
codegen_flags: <defaults>
</compile_context>

<pallas_src>
import functools
import math

import jax
import jax.numpy as jnp
from jax.experimental import pallas as pl
from jax.experimental.pallas import tpu as pltpu

_SQRT2_INV = 1.0 / math.sqrt(2.0)


# ------------------------------ helpers -----------------------------------

def _round_up(x, m):
    return ((x + m - 1) // m) * m


def _pad_rows(x, mult):
    m = x.shape[0]
    mp = _round_up(m, mult)
    if mp != m:
        x = jnp.pad(x, ((0, mp - m),) + ((0, 0),) * (x.ndim - 1))
    return x


def _gelu_f32(x):
    # exact (erf) GELU, matching nn.GELU default
    return 0.5 * x * (1.0 + jax.lax.erf(x * _SQRT2_INV))


def _layernorm_f32(x, g, b, eps):
    mu = jnp.mean(x, axis=-1, keepdims=True)
    xc = x - mu
    var = jnp.mean(xc * xc, axis=-1, keepdims=True)
    return xc * jax.lax.rsqrt(var + eps) * g + b


# ----------------------------- Pallas kernels ------------------------------

def _ln_qkv_kernel(x_ref, g_ref, b_ref, w_ref, wb_ref, o_ref, *, eps, mxu_dtype):
    """Fused LayerNorm -> Linear (qkv projection)."""
    x = x_ref[...].astype(jnp.float32)
    y = _layernorm_f32(x, g_ref[...].astype(jnp.float32),
                       b_ref[...].astype(jnp.float32), eps)
    out = jnp.dot(y.astype(mxu_dtype), w_ref[...].astype(mxu_dtype),
                  preferred_element_type=jnp.float32)
    out = out + wb_ref[...].astype(jnp.float32)
    o_ref[...] = out.astype(o_ref.dtype)


def _proj_residual_kernel(x_ref, w_ref, wb_ref, res_ref, o_ref, *, mxu_dtype):
    """Fused output projection + residual add."""
    x = x_ref[...].astype(jnp.float32)
    y = jnp.dot(x.astype(mxu_dtype), w_ref[...].astype(mxu_dtype),
                preferred_element_type=jnp.float32)
    y = y + wb_ref[...].astype(jnp.float32) + res_ref[...].astype(jnp.float32)
    o_ref[...] = y.astype(o_ref.dtype)


def _mlp_block_kernel(x_ref, g_ref, b_ref, w1_ref, b1_ref, w2_ref, b2_ref,
                      o_ref, *, eps, mxu_dtype):
    """Fused norm2 -> fc1 -> GELU -> fc2 + residual (hidden stays in VMEM)."""
    x = x_ref[...].astype(jnp.float32)
    y = _layernorm_f32(x, g_ref[...].astype(jnp.float32),
                       b_ref[...].astype(jnp.float32), eps)
    h = jnp.dot(y.astype(mxu_dtype), w1_ref[...].astype(mxu_dtype),
                preferred_element_type=jnp.float32)
    h = h + b1_ref[...].astype(jnp.float32)
    h = _gelu_f32(h)
    z = jnp.dot(h.astype(mxu_dtype), w2_ref[...].astype(mxu_dtype),
                preferred_element_type=jnp.float32)
    z = z + b2_ref[...].astype(jnp.float32)
    o_ref[...] = (x + z).astype(o_ref.dtype)


def _oca_attn_kernel(q_ref, k_ref, v_ref, bias_ref, o_ref, *, num_heads, scale):
    """Overlapping-window cross attention.

    Processes a batch of windows and ALL heads per grid step. The head split
    is done inside the kernel (static lane slices of the channel axis) and the
    result is re-concatenated along channels so both inputs and output are
    presented lane-dense as (Bw, seq, c) blocks.
    """
    q = q_ref[...].astype(jnp.float32) * scale        # (Bw, nq, c)
    k = k_ref[...].astype(jnp.float32)                # (Bw, n,  c)
    v = v_ref[...].astype(jnp.float32)                # (Bw, n,  c)
    bias = bias_ref[...].astype(jnp.float32)          # (nh, nq, n)

    c = q.shape[-1]
    d = c // num_heads

    heads_out = []
    for hh in range(num_heads):
        lo, hi = hh * d, (hh + 1) * d
        qh = q[:, :, lo:hi]                           # (Bw, nq, d)
        kh = k[:, :, lo:hi]                           # (Bw, n,  d)
        vh = v[:, :, lo:hi]                           # (Bw, n,  d)
        s = jnp.einsum('bqd,bkd->bqk', qh, kh,
                       preferred_element_type=jnp.float32)    # (Bw, nq, n)
        s = s + bias[hh][None, :, :]
        s = s - jnp.max(s, axis=-1, keepdims=True)
        p = jnp.exp(s)
        p = p * pl.reciprocal(jnp.sum(p, axis=-1, keepdims=True), approx=True)
        heads_out.append(jnp.einsum('bqk,bkd->bqd', p, vh,
                                    preferred_element_type=jnp.float32))
    o_ref[...] = jnp.concatenate(heads_out, axis=-1).astype(o_ref.dtype)


# ----------------------------- kernel wrappers -----------------------------

def fused_ln_linear(x, g, b, w, wb, *, eps=1e-5, block_rows=256,
                    mxu_dtype=jnp.float32):
    M, K = x.shape
    N = w.shape[1]
    tm = min(block_rows, _round_up(M, 8))
    xp = _pad_rows(x, tm)
    Mp = xp.shape[0]
    out = pl.pallas_call(
        functools.partial(_ln_qkv_kernel, eps=eps, mxu_dtype=mxu_dtype),
        out_shape=jax.ShapeDtypeStruct((Mp, N), x.dtype),
        grid=(Mp // tm,),
        in_specs=[
            pl.BlockSpec((tm, K), lambda i: (i, 0)),
            pl.BlockSpec((1, K), lambda i: (0, 0)),
            pl.BlockSpec((1, K), lambda i: (0, 0)),
            pl.BlockSpec((K, N), lambda i: (0, 0)),
            pl.BlockSpec((1, N), lambda i: (0, 0)),
        ],
        out_specs=pl.BlockSpec((tm, N), lambda i: (i, 0)),
        compiler_params=pltpu.CompilerParams(dimension_semantics=("parallel",)),
    )(xp, g.reshape(1, K), b.reshape(1, K), w, wb.reshape(1, N))
    return out[:M]


def fused_proj_residual(x, w, wb, res, *, block_rows=256, mxu_dtype=jnp.float32):
    M, K = x.shape
    N = w.shape[1]
    tm = min(block_rows, _round_up(M, 8))
    xp = _pad_rows(x, tm)
    rp = _pad_rows(res, tm)
    Mp = xp.shape[0]
    out = pl.pallas_call(
        functools.partial(_proj_residual_kernel, mxu_dtype=mxu_dtype),
        out_shape=jax.ShapeDtypeStruct((Mp, N), x.dtype),
        grid=(Mp // tm,),
        in_specs=[
            pl.BlockSpec((tm, K), lambda i: (i, 0)),
            pl.BlockSpec((K, N), lambda i: (0, 0)),
            pl.BlockSpec((1, N), lambda i: (0, 0)),
            pl.BlockSpec((tm, N), lambda i: (i, 0)),
        ],
        out_specs=pl.BlockSpec((tm, N), lambda i: (i, 0)),
        compiler_params=pltpu.CompilerParams(dimension_semantics=("parallel",)),
    )(xp, w, wb.reshape(1, N), rp)
    return out[:M]


def fused_mlp_block(x, g, b, w1, b1, w2, b2, *, eps=1e-5, block_rows=256,
                    mxu_dtype=jnp.float32):
    M, C = x.shape
    H = w1.shape[1]
    tm = min(block_rows, _round_up(M, 8))
    xp = _pad_rows(x, tm)
    Mp = xp.shape[0]
    out = pl.pallas_call(
        functools.partial(_mlp_block_kernel, eps=eps, mxu_dtype=mxu_dtype),
        out_shape=jax.ShapeDtypeStruct((Mp, C), x.dtype),
        grid=(Mp // tm,),
        in_specs=[
            pl.BlockSpec((tm, C), lambda i: (i, 0)),
            pl.BlockSpec((1, C), lambda i: (0, 0)),
            pl.BlockSpec((1, C), lambda i: (0, 0)),
            pl.BlockSpec((C, H), lambda i: (0, 0)),
            pl.BlockSpec((1, H), lambda i: (0, 0)),
            pl.BlockSpec((H, C), lambda i: (0, 0)),
            pl.BlockSpec((1, C), lambda i: (0, 0)),
        ],
        out_specs=pl.BlockSpec((tm, C), lambda i: (i, 0)),
        compiler_params=pltpu.CompilerParams(dimension_semantics=("parallel",)),
    )(xp, g.reshape(1, C), b.reshape(1, C), w1, b1.reshape(1, H),
      w2, b2.reshape(1, C))
    return out[:M]


def window_attention(q, k, v, bias, scale, *, num_heads, block_windows=64):
    # q: (b_, nq, c)   k, v: (b_, n, c)   bias: (nh, nq, n)   -> (b_, nq, c)
    b_, nq, c = q.shape
    n = k.shape[1]
    nh = num_heads
    bw = min(block_windows, b_)
    bp = _round_up(b_, bw)
    if bp != b_:
        padw = bp - b_
        q = jnp.pad(q, ((0, padw), (0, 0), (0, 0)))
        k = jnp.pad(k, ((0, padw), (0, 0), (0, 0)))
        v = jnp.pad(v, ((0, padw), (0, 0), (0, 0)))
    out = pl.pallas_call(
        functools.partial(_oca_attn_kernel, num_heads=nh, scale=scale),
        out_shape=jax.ShapeDtypeStruct((bp, nq, c), q.dtype),
        grid=(bp // bw,),
        in_specs=[
            pl.BlockSpec((bw, nq, c), lambda i: (i, 0, 0)),
            pl.BlockSpec((bw, n, c), lambda i: (i, 0, 0)),
            pl.BlockSpec((bw, n, c), lambda i: (i, 0, 0)),
            pl.BlockSpec((nh, nq, n), lambda i: (0, 0, 0)),  # bias stays resident
        ],
        out_specs=pl.BlockSpec((bw, nq, c), lambda i: (i, 0, 0)),
        compiler_params=pltpu.CompilerParams(dimension_semantics=("parallel",)),
    )(q, k, v, bias)
    return out[:b_]


# ------------------------------ OCAB module --------------------------------

def calc_rpi_oca(ws, ows):
    """Relative-position index (ws*ws, ows*ows) with values in [0, (ws+ows-1)^2)."""
    co = jnp.stack(jnp.meshgrid(jnp.arange(ws), jnp.arange(ws), indexing="ij"))
    co = co.reshape(2, -1)                                  # (2, ws*ws)
    ce = jnp.stack(jnp.meshgrid(jnp.arange(ows), jnp.arange(ows), indexing="ij"))
    ce = ce.reshape(2, -1)                                  # (2, ows*ows)
    rel = ce[:, None, :] - co[:, :, None]                   # (2, ws*ws, ows*ows)
    rel = rel.transpose(1, 2, 0) + (ws - 1)                 # shift to start at 0
    idx = rel[..., 0] * (ws + ows - 1) + rel[..., 1]
    return idx.astype(jnp.int32)


def init_ocab_params(key, dim, window_size, overlap_win_size, num_heads, mlp_ratio=2):
    hidden = int(dim * mlp_ratio)
    table = (window_size + overlap_win_size - 1) ** 2
    ks = jax.random.split(key, 6)
    s = 0.05
    return {
        "norm1_g": jnp.ones((dim,), jnp.float32),
        "norm1_b": jnp.zeros((dim,), jnp.float32),
        "qkv_w": s * jax.random.normal(ks[0], (dim, 3 * dim), jnp.float32),
        "qkv_b": jnp.zeros((3 * dim,), jnp.float32),
        "rpb_table": 0.02 * jax.random.normal(ks[1], (table, num_heads), jnp.float32),
        "proj_w": s * jax.random.normal(ks[2], (dim, dim), jnp.float32),
        "proj_b": jnp.zeros((dim,), jnp.float32),
        "norm2_g": jnp.ones((dim,), jnp.float32),
        "norm2_b": jnp.zeros((dim,), jnp.float32),
        "fc1_w": s * jax.random.normal(ks[3], (dim, hidden), jnp.float32),
        "fc1_b": jnp.zeros((hidden,), jnp.float32),
        "fc2_w": s * jax.random.normal(ks[4], (hidden, dim), jnp.float32),
        "fc2_b": jnp.zeros((dim,), jnp.float32),
    }


def ocab_forward(p, x, x_size, rpi, *, window_size, overlap_win_size, num_heads,
                 block_rows=256, block_windows=64, mxu_dtype=jnp.float32):
    h, w = x_size
    b, L, c = x.shape
    ws, ows, nh = window_size, overlap_win_size, num_heads
    d = c // nh
    scale = d ** -0.5
    nwh, nww = h // ws, w // ws
    pad = (ows - ws) // 2

    x2d = x.reshape(b * L, c)                    # also the residual (shortcut)

    # ---- fused norm1 + qkv projection (Pallas) ----
    qkv = fused_ln_linear(x2d, p["norm1_g"], p["norm1_b"], p["qkv_w"], p["qkv_b"],
                          block_rows=block_rows, mxu_dtype=mxu_dtype)
    qkv = qkv.reshape(b, h, w, 3, c)
    q = qkv[:, :, :, 0, :]                                                  # (b,h,w,c)
    kv = jnp.concatenate([qkv[:, :, :, 1, :], qkv[:, :, :, 2, :]], axis=-1)  # (b,h,w,2c)

    # ---- q: non-overlapping window partition (plain JAX data movement) ----
    q_win = q.reshape(b, nwh, ws, nww, ws, c).transpose(0, 1, 3, 2, 4, 5)
    q_win = q_win.reshape(b * nwh * nww, ws * ws, c)

    # ---- kv: overlapping windows (nn.Unfold, zero pad, stride ws, kernel ows) ----
    # TODO(synk): at real HAT sizes, feed the padded NHWC kv straight to the
    # attention kernel via scalar-prefetched window offsets (Element/ds
    # index_map DMA) instead of materializing this gather in HBM.
    kv_pad = jnp.pad(kv, ((0, 0), (pad, pad), (pad, pad), (0, 0)))
    row_idx = (jnp.arange(nwh) * ws)[:, None] + jnp.arange(ows)[None, :]   # (nwh, ows)
    col_idx = (jnp.arange(nww) * ws)[:, None] + jnp.arange(ows)[None, :]   # (nww, ows)
    patches = kv_pad[:, row_idx, :, :]             # (b, nwh, ows, Wp, 2c)
    patches = patches[:, :, :, col_idx, :]         # (b, nwh, ows, nww, ows, 2c)
    patches = patches.transpose(0, 1, 3, 2, 4, 5)  # (b, nwh, nww, ows, ows, 2c)
    kv_win = patches.reshape(b * nwh * nww, ows * ows, 2 * c)
    k_win, v_win = kv_win[..., :c], kv_win[..., c:]

    # ---- relative position bias: (nh, ws*ws, ows*ows) ----
    bias = p["rpb_table"][rpi.reshape(-1)]
    bias = bias.reshape(ws * ws, ows * ows, nh).transpose(2, 0, 1)

    # ---- windowed cross attention (Pallas; all heads + window batch / step) ----
    attn = window_attention(q_win, k_win, v_win, bias, scale,
                            num_heads=nh, block_windows=block_windows)   # (b_, nq, c)

    # ---- window reverse (plain JAX data movement) ----
    xr = attn.reshape(b, nwh, nww, ws, ws, c).transpose(0, 1, 3, 2, 4, 5)
    xr = xr.reshape(b * L, c)

    # ---- fused output projection + residual (Pallas) ----
    xr = fused_proj_residual(xr, p["proj_w"], p["proj_b"], x2d,
                             block_rows=block_rows, mxu_dtype=mxu_dtype)

    # ---- fused norm2 -> fc1 -> GELU -> fc2 + residual (Pallas); dropout p=0 ----
    y = fused_mlp_block(xr, p["norm2_g"], p["norm2_b"],
                        p["fc1_w"], p["fc1_b"], p["fc2_w"], p["fc2_b"],
                        block_rows=block_rows, mxu_dtype=mxu_dtype)
    return y.reshape(b, L, c)


# --------------------------------- main -------------------------------------

if __name__ == "__main__":
    dim = 32
    num_heads = 4
    window_size = 4
    overlap_ratio = 0.5
    b, h, w = 2, 8, 8
    ows = int(window_size * overlap_ratio) + window_size     # overlap_win_size = 6

    key = jax.random.PRNGKey(0)
    kx, kp = jax.random.split(key)
    x = jax.random.normal(kx, (b, h * w, dim), jnp.float32)
    rpi = calc_rpi_oca(window_size, ows)
    params = init_ocab_params(kp, dim, window_size, ows, num_heads, mlp_ratio=2)

    out = ocab_forward(params, x, (h, w), rpi,
                       window_size=window_size,
                       overlap_win_size=ows,
                       num_heads=num_heads)
    out = jax.block_until_ready(out)
    assert out.shape == (b, h * w, dim)
    assert bool(jnp.all(jnp.isfinite(out)))
    print("KERNEL_OK")
</pallas_src>

<mosaic_0001>
module attributes {stable_mosaic.version = 11 : i64} {
  func.func @_ln_qkv_kernel(%arg0: i32, %arg1: memref<128x32xf32, #tpu.memory_space<vmem>>, %arg2: memref<1x32xf32, #tpu.memory_space<vmem>>, %arg3: memref<1x32xf32, #tpu.memory_space<vmem>>, %arg4: memref<32x96xf32, #tpu.memory_space<vmem>>, %arg5: memref<1x96xf32, #tpu.memory_space<vmem>>, %arg6: memref<128x96xf32, #tpu.memory_space<vmem>>) attributes {dimension_semantics = [#tpu.dimension_semantics<parallel>], iteration_bounds = array<i64: 1>, scalar_prefetch = 0 : i64, scratch_operands = 0 : i64, tpu.core_type = #tpu.core_type<tc>, window_params = [{transform_indices = @transform_0, window_bounds = array<i64: 128, 32>}, {pipeline_mode = #tpu.pipeline_mode<synchronous>, transform_indices = @transform_1, window_bounds = array<i64: 1, 32>}, {pipeline_mode = #tpu.pipeline_mode<synchronous>, transform_indices = @transform_2, window_bounds = array<i64: 1, 32>}, {pipeline_mode = #tpu.pipeline_mode<synchronous>, transform_indices = @transform_3, window_bounds = array<i64: 32, 96>}, {pipeline_mode = #tpu.pipeline_mode<synchronous>, transform_indices = @transform_4, window_bounds = array<i64: 1, 96>}, {transform_indices = @transform_5, window_bounds = array<i64: 128, 96>}]} {
    %c0 = arith.constant 0 : index
    %c0_0 = arith.constant 0 : index
    %0 = vector.load %arg1[%c0, %c0_0] : memref<128x32xf32, #tpu.memory_space<vmem>>, vector<128x32xf32>
    %c0_1 = arith.constant 0 : index
    %c0_2 = arith.constant 0 : index
    %1 = vector.load %arg2[%c0_1, %c0_2] : memref<1x32xf32, #tpu.memory_space<vmem>>, vector<1x32xf32>
    %c0_3 = arith.constant 0 : index
    %c0_4 = arith.constant 0 : index
    %2 = vector.load %arg3[%c0_3, %c0_4] : memref<1x32xf32, #tpu.memory_space<vmem>>, vector<1x32xf32>
    %cst = arith.constant dense<0.000000e+00> : vector<128xf32>
    %3 = vector.multi_reduction <add>, %0, %cst [1] : vector<128x32xf32> to vector<128xf32>
    %4 = vector.shape_cast %3 : vector<128xf32> to vector<128x1xf32>
    %cst_5 = arith.constant 3.200000e+01 : f32
    %5 = vector.broadcast %cst_5 : f32 to vector<128x1xf32>
    %6 = arith.divf %4, %5 : vector<128x1xf32>
    %7 = vector.broadcast %6 : vector<128x1xf32> to vector<128x32xf32>
    %8 = arith.subf %0, %7 : vector<128x32xf32>
    %9 = arith.mulf %8, %8 : vector<128x32xf32>
    %cst_6 = arith.constant dense<0.000000e+00> : vector<128xf32>
    %10 = vector.multi_reduction <add>, %9, %cst_6 [1] : vector<128x32xf32> to vector<128xf32>
    %11 = vector.shape_cast %10 : vector<128xf32> to vector<128x1xf32>
    %cst_7 = arith.constant 3.200000e+01 : f32
    %12 = vector.broadcast %cst_7 : f32 to vector<128x1xf32>
    %13 = arith.divf %11, %12 : vector<128x1xf32>
    %cst_8 = arith.constant 9.99999974E-6 : f32
    %14 = vector.broadcast %cst_8 : f32 to vector<128x1xf32>
    %15 = arith.addf %13, %14 : vector<128x1xf32>
    %16 = math.rsqrt %15 : vector<128x1xf32>
    %17 = vector.broadcast %16 : vector<128x1xf32> to vector<128x32xf32>
    %18 = arith.mulf %8, %17 : vector<128x32xf32>
    %19 = vector.broadcast %1 : vector<1x32xf32> to vector<128x32xf32>
    %20 = arith.mulf %18, %19 : vector<128x32xf32>
    %21 = vector.broadcast %2 : vector<1x32xf32> to vector<128x32xf32>
    %22 = arith.addf %20, %21 : vector<128x32xf32>
    %c0_9 = arith.constant 0 : index
    %c0_10 = arith.constant 0 : index
    %23 = vector.load %arg4[%c0_9, %c0_10] : memref<32x96xf32, #tpu.memory_space<vmem>>, vector<32x96xf32>
    %cst_11 = arith.constant dense<0.000000e+00> : vector<128x96xf32>
    %24 = tpu.matmul %22, %23, %cst_11 {dimension_numbers = #tpu.dot_dimension_numbers<[1], [0], [0], [1], [0, 0, 1, 1], [], []>} : vector<128x32xf32>, vector<32x96xf32>, vector<128x96xf32> -> vector<128x96xf32>
    %c0_12 = arith.constant 0 : index
    %c0_13 = arith.constant 0 : index
    %25 = vector.load %arg5[%c0_12, %c0_13] : memref<1x96xf32, #tpu.memory_space<vmem>>, vector<1x96xf32>
    %26 = vector.broadcast %25 : vector<1x96xf32> to vector<128x96xf32>
    %27 = arith.addf %24, %26 : vector<128x96xf32>
    %c0_14 = arith.constant 0 : index
    %c0_15 = arith.constant 0 : index
    %28 = vector.load %arg6[%c0_14, %c0_15] : memref<128x96xf32, #tpu.memory_space<vmem>>, vector<128x96xf32>
    tpu.vector_store %arg6[%c0_14, %c0_15], %27 {strides = array<i32>} : memref<128x96xf32, #tpu.memory_space<vmem>>, vector<128x96xf32>,
    return
  }
  func.func @transform_0(%arg0: i32) -> (i32, i32) {
    %c0_i32 = arith.constant 0 : i32
    %c0_i32_0 = arith.constant 0 : i32
    return %arg0, %c0_i32 : i32, i32
  }
  func.func @transform_1(%arg0: i32) -> (i32, i32) {
    %c0_i32 = arith.constant 0 : i32
    %c0_i32_0 = arith.constant 0 : i32
    %c0_i32_1 = arith.constant 0 : i32
    return %c0_i32, %c0_i32_0 : i32, i32
  }
  func.func @transform_2(%arg0: i32) -> (i32, i32) {
    %c0_i32 = arith.constant 0 : i32
    %c0_i32_0 = arith.constant 0 : i32
    %c0_i32_1 = arith.constant 0 : i32
    return %c0_i32, %c0_i32_0 : i32, i32
  }
  func.func @transform_3(%arg0: i32) -> (i32, i32) {
    %c0_i32 = arith.constant 0 : i32
    %c0_i32_0 = arith.constant 0 : i32
    %c0_i32_1 = arith.constant 0 : i32
    return %c0_i32, %c0_i32_0 : i32, i32
  }
  func.func @transform_4(%arg0: i32) -> (i32, i32) {
    %c0_i32 = arith.constant 0 : i32
    %c0_i32_0 = arith.constant 0 : i32
    %c0_i32_1 = arith.constant 0 : i32
    return %c0_i32, %c0_i32_0 : i32, i32
  }
  func.func @transform_5(%arg0: i32) -> (i32, i32) {
    %c0_i32 = arith.constant 0 : i32
    %c0_i32_0 = arith.constant 0 : i32
    return %arg0, %c0_i32 : i32, i32
  }
}

</mosaic_0001>

<llo_original>
// kernel: tpu_custom_call.1
$region0: #{tpu_custom_call.1}
  #allocation0 [shape = 'u32[]', space=smem, size = 0x4, offset = 0x4, fixed_abs, tag = 'smem constant byte address 0x4 - core index']
  #allocation1 [shape = 'u32[144,128]{1,0:T(1,128)}', space=vmem, size = 0x12000, scoped, tag = 'internal scratch']
  %s0 = inlined_call_operand.vmem [shape: f32[128,32], index: 0, kind: input, shape index: {}]
  %s1 = inlined_call_operand.vmem [shape: f32[1,32], index: 1, kind: input, shape index: {}]
  %s2 = inlined_call_operand.vmem [shape: f32[1,32], index: 2, kind: input, shape index: {}]
  %s3 = inlined_call_operand.vmem [shape: f32[32,96], index: 3, kind: input, shape index: {}]
  %s4 = inlined_call_operand.vmem [shape: f32[1,96], index: 4, kind: input, shape index: {}]
  %s5 = inlined_call_operand.vmem [shape: f32[128,96], index: 5, kind: output, shape index: {}]
  %s6 = sld [smem:[#allocation0]]
  $region30: #{tpu_custom_call.1} parent=0
    _
  %s8 = ssub.s32 1, %s6
  %s9 = scalar_select 0, %s8, %s6
  // Predicated region
  $region2: #{tpu_custom_call.1} parent=0 // pred_check
    _
  $region3: #{tpu_custom_call.1} parent=0 // pred_check_branch
    %11 = sbr.rel (0) target = $region5
  $region4: #{tpu_custom_call.1} parent=0 // pred_region
    _
  $region5: #{tpu_custom_call.1} parent=0 // pred_fallthru
    _
  // Predicated region
  $region6: #{tpu_custom_call.1} parent=0 // pred_check
    _
  $region7: #{tpu_custom_call.1} parent=0 // pred_check_branch
    %13 = sbr.rel (0) target = $region9
  $region8: #{tpu_custom_call.1} parent=0 // pred_region
    _
  $region9: #{tpu_custom_call.1} parent=0 // pred_fallthru
    _
  // Predicated region
  $region10: #{tpu_custom_call.1} parent=0 // pred_check
    _
  $region11: #{tpu_custom_call.1} parent=0 // pred_check_branch
    %15 = sbr.rel (0) target = $region13
  $region12: #{tpu_custom_call.1} parent=0 // pred_region
    _
  $region13: #{tpu_custom_call.1} parent=0 // pred_fallthru
    _
  // Predicated region
  $region14: #{tpu_custom_call.1} parent=0 // pred_check
    _
  $region15: #{tpu_custom_call.1} parent=0 // pred_check_branch
    %17 = sbr.rel (0) target = $region17
  $region16: #{tpu_custom_call.1} parent=0 // pred_region
    _
  $region17: #{tpu_custom_call.1} parent=0 // pred_fallthru
    _
  // Predicated region
  $region18: #{tpu_custom_call.1} parent=0 // pred_check
    _
  $region19: #{tpu_custom_call.1} parent=0 // pred_check_branch
    %19 = sbr.rel (0) target = $region21
  $region20: #{tpu_custom_call.1} parent=0 // pred_region
    _
  $region21: #{tpu_custom_call.1} parent=0 // pred_fallthru
    _
  %v20 = vld [vmem:[%s0] sm:$0xff]
  %v21 = vld [vmem:[%s0 + $0x8] sm:$0xff]
  %v22 = vld [vmem:[%s0 + $0x10] sm:$0xff]
  %v23 = vld [vmem:[%s0 + $0x18] sm:$0xff]
  %v24 = vld [vmem:[%s0 + $0x20] sm:$0xff]
  %v25 = vld [vmem:[%s0 + $0x28] sm:$0xff]
  %v26 = vld [vmem:[%s0 + $0x30] sm:$0xff]
  %v27 = vld [vmem:[%s0 + $0x38] sm:$0xff]
  %v28 = vld [vmem:[%s0 + $0x40] sm:$0xff]
  %v29 = vld [vmem:[%s0 + $0x48] sm:$0xff]
  %v30 = vld [vmem:[%s0 + $0x50] sm:$0xff]
  %v31 = vld [vmem:[%s0 + $0x58] sm:$0xff]
  %v32 = vld [vmem:[%s0 + $0x60] sm:$0xff]
  %v33 = vld [vmem:[%s0 + $0x68] sm:$0xff]
  %v34 = vld [vmem:[%s0 + $0x70] sm:$0xff]
  %v35 = vld [vmem:[%s0 + $0x78] sm:$0xff]
  %v36 = vld [vmem:[%s1] sm:$0x1]
  %v37 = vld [vmem:[%s2] sm:$0x1]
  %vm38 = vcmask 261120
  %v39 = vsel %vm38, %v20, 0.0
  %40 = vadd.xlane.f32.xlu0 %v39
  %v41 = vpop.xlane.xlu0 %40
  %v42 = vsel %vm38, %v21, 0.0
  %43 = vadd.xlane.f32.xlu0 %v42
  %v44 = vpop.xlane.xlu0 %43
  %v45 = vsel %vm38, %v22, 0.0
  %46 = vadd.xlane.f32.xlu0 %v45
  %v47 = vpop.xlane.xlu0 %46
  %v48 = vsel %vm38, %v23, 0.0
  %49 = vadd.xlane.f32.xlu0 %v48
  %v50 = vpop.xlane.xlu0 %49
  %v51 = vsel %vm38, %v24, 0.0
  %52 = vadd.xlane.f32.xlu0 %v51
  %v53 = vpop.xlane.xlu0 %52
  %v54 = vsel %vm38, %v25, 0.0
  %55 = vadd.xlane.f32.xlu0 %v54
  %v56 = vpop.xlane.xlu0 %55
  %v57 = vsel %vm38, %v26, 0.0
  %58 = vadd.xlane.f32.xlu0 %v57
  %v59 = vpop.xlane.xlu0 %58
  %v60 = vsel %vm38, %v27, 0.0
  %61 = vadd.xlane.f32.xlu0 %v60
  %v62 = vpop.xlane.xlu0 %61
  %v63 = vsel %vm38, %v28, 0.0
  %64 = vadd.xlane.f32.xlu0 %v63
  %v65 = vpop.xlane.xlu0 %64
  %v66 = vsel %vm38, %v29, 0.0
  %67 = vadd.xlane.f32.xlu0 %v66
  %v68 = vpop.xlane.xlu0 %67
  %v69 = vsel %vm38, %v30, 0.0
  %70 = vadd.xlane.f32.xlu0 %v69
  %v71 = vpop.xlane.xlu0 %70
  %v72 = vsel %vm38, %v31, 0.0
  %73 = vadd.xlane.f32.xlu0 %v72
  %v74 = vpop.xlane.xlu0 %73
  %v75 = vsel %vm38, %v32, 0.0
  %76 = vadd.xlane.f32.xlu0 %v75
  %v77 = vpop.xlane.xlu0 %76
  %v78 = vsel %vm38, %v33, 0.0
  %79 = vadd.xlane.f32.xlu0 %v78
  %v80 = vpop.xlane.xlu0 %79
  %v81 = vsel %vm38, %v34, 0.0
  %82 = vadd.xlane.f32.xlu0 %v81
  %v83 = vpop.xlane.xlu0 %82
  %v84 = vsel %vm38, %v35, 0.0
  %85 = vadd.xlane.f32.xlu0 %v84
  %v86 = vpop.xlane.xlu0 %85
  %v87 = vrcp.pop 32.0
  %v88 = vmul.f32 %v41, %v87
  %v89 = vmul.f32 %v44, %v87
  %v90 = vmul.f32 %v47, %v87
  %v91 = vmul.f32 %v50, %v87
  %v92 = vmul.f32 %v53, %v87
  %v93 = vmul.f32 %v56, %v87
  %v94 = vmul.f32 %v59, %v87
  %v95 = vmul.f32 %v62, %v87
  %v96 = vmul.f32 %v65, %v87
  %v97 = vmul.f32 %v68, %v87
  %v98 = vmul.f32 %v71, %v87
  %v99 = vmul.f32 %v74, %v87
  %v100 = vmul.f32 %v77, %v87
  %v101 = vmul.f32 %v80, %v87
  %v102 = vmul.f32 %v83, %v87
  %v103 = vmul.f32 %v86, %v87
  %v104 = vsub.f32 %v20, %v88
  %v105 = vsub.f32 %v21, %v89
  %v106 = vsub.f32 %v22, %v90
  %v107 = vsub.f32 %v23, %v91
  %v108 = vsub.f32 %v24, %v92
  %v109 = vsub.f32 %v25, %v93
  %v110 = vsub.f32 %v26, %v94
  %v111 = vsub.f32 %v27, %v95
  %v112 = vsub.f32 %v28, %v96
  %v113 = vsub.f32 %v29, %v97
  %v114 = vsub.f32 %v30, %v98
  %v115 = vsub.f32 %v31, %v99
  %v116 = vsub.f32 %v32, %v100
  %v117 = vsub.f32 %v33, %v101
  %v118 = vsub.f32 %v34, %v102
  %v119 = vsub.f32 %v35, %v103
  %v120 = vmul.f32 %v104, %v104
  %v121 = vmul.f32 %v105, %v105
  %v122 = vmul.f32 %v106, %v106
  %v123 = vmul.f32 %v107, %v107
  %v124 = vmul.f32 %v108, %v108
  %v125 = vmul.f32 %v109, %v109
  %v126 = vmul.f32 %v110, %v110
  %v127 = vmul.f32 %v111, %v111
  %v128 = vmul.f32 %v112, %v112
  %v129 = vmul.f32 %v113, %v113
  %v130 = vmul.f32 %v114, %v114
  %v131 = vmul.f32 %v115, %v115
  %v132 = vmul.f32 %v116, %v116
  %v133 = vmul.f32 %v117, %v117
  %v134 = vmul.f32 %v118, %v118
  %v135 = vmul.f32 %v119, %v119
  %v136 = vsel %vm38, %v120, 0.0
  %137 = vadd.xlane.f32.xlu0 %v136
  %v138 = vpop.xlane.xlu0 %137
  %v139 = vsel %vm38, %v121, 0.0
  %140 = vadd.xlane.f32.xlu0 %v139
  %v141 = vpop.xlane.xlu0 %140
  %v142 = vsel %vm38, %v122, 0.0
  %143 = vadd.xlane.f32.xlu0 %v142
  %v144 = vpop.xlane.xlu0 %143
  %v145 = vsel %vm38, %v123, 0.0
  %146 = vadd.xlane.f32.xlu0 %v145
  %v147 = vpop.xlane.xlu0 %146
  %v148 = vsel %vm38, %v124, 0.0
  %149 = vadd.xlane.f32.xlu0 %v148
  %v150 = vpop.xlane.xlu0 %149
  %v151 = vsel %vm38, %v125, 0.0
  %152 = vadd.xlane.f32.xlu0 %v151
  %v153 = vpop.xlane.xlu0 %152
  %v154 = vsel %vm38, %v126, 0.0
  %155 = vadd.xlane.f32.xlu0 %v154
  %v156 = vpop.xlane.xlu0 %155
  %v157 = vsel %vm38, %v127, 0.0
  %158 = vadd.xlane.f32.xlu0 %v157
  %v159 = vpop.xlane.xlu0 %158
  %v160 = vsel %vm38, %v128, 0.0
  %161 = vadd.xlane.f32.xlu0 %v160
  %v162 = vpop.xlane.xlu0 %161
  %v163 = vsel %vm38, %v129, 0.0
  %164 = vadd.xlane.f32.xlu0 %v163
  %v165 = vpop.xlane.xlu0 %164
  %v166 = vsel %vm38, %v130, 0.0
  %167 = vadd.xlane.f32.xlu0 %v166
  %v168 = vpop.xlane.xlu0 %167
  %v169 = vsel %vm38, %v131, 0.0
  %170 = vadd.xlane.f32.xlu0 %v169
  %v171 = vpop.xlane.xlu0 %170
  %v172 = vsel %vm38, %v132, 0.0
  %173 = vadd.xlane.f32.xlu0 %v172
  %v174 = vpop.xlane.xlu0 %173
  %v175 = vsel %vm38, %v133, 0.0
  %176 = vadd.xlane.f32.xlu0 %v175
  %v177 = vpop.xlane.xlu0 %176
  %v178 = vsel %vm38, %v134, 0.0
  %179 = vadd.xlane.f32.xlu0 %v178
  %v180 = vpop.xlane.xlu0 %179
  %v181 = vsel %vm38, %v135, 0.0
  %182 = vadd.xlane.f32.xlu0 %v181
  %v183 = vpop.xlane.xlu0 %182
  %v184 = vmul.f32 %v138, %v87
  %v185 = vmul.f32 %v141, %v87
  %v186 = vmul.f32 %v144, %v87
  %v187 = vmul.f32 %v147, %v87
  %v188 = vmul.f32 %v150, %v87
  %v189 = vmul.f32 %v153, %v87
  %v190 = vmul.f32 %v156, %v87
  %v191 = vmul.f32 %v159, %v87
  %v192 = vmul.f32 %v162, %v87
  %v193 = vmul.f32 %v165, %v87
  %v194 = vmul.f32 %v168, %v87
  %v195 = vmul.f32 %v171, %v87
  %v196 = vmul.f32 %v174, %v87
  %v197 = vmul.f32 %v177, %v87
  %v198 = vmul.f32 %v180, %v87
  %v199 = vmul.f32 %v183, %v87
  %v200 = vadd.f32 %v184, 1e-05
  %v201 = vadd.f32 %v185, 1e-05
  %v202 = vadd.f32 %v186, 1e-05
  %v203 = vadd.f32 %v187, 1e-05
  %v204 = vadd.f32 %v188, 1e-05
  %v205 = vadd.f32 %v189, 1e-05
  %v206 = vadd.f32 %v190, 1e-05
  %v207 = vadd.f32 %v191, 1e-05
  %v208 = vadd.f32 %v192, 1e-05
  %v209 = vadd.f32 %v193, 1e-05
  %v210 = vadd.f32 %v194, 1e-05
  %v211 = vadd.f32 %v195, 1e-05
  %v212 = vadd.f32 %v196, 1e-05
  %v213 = vadd.f32 %v197, 1e-05
  %v214 = vadd.f32 %v198, 1e-05
  %v215 = vadd.f32 %v199, 1e-05
  %v216 = vrsqrt.pop %v200
  %v217 = vrsqrt.pop %v201
  %v218 = vrsqrt.pop %v202
  %v219 = vrsqrt.pop %v203
  %v220 = vrsqrt.pop %v204
  %v221 = vrsqrt.pop %v205
  %v222 = vrsqrt.pop %v206
  %v223 = vrsqrt.pop %v207
  %v224 = vrsqrt.pop %v208
  %v225 = vrsqrt.pop %v209
  %v226 = vrsqrt.pop %v210
  %v227 = vrsqrt.pop %v211
  %v228 = vrsqrt.pop %v212
  %v229 = vrsqrt.pop %v213
  %v230 = vrsqrt.pop %v214
  %v231 = vrsqrt.pop %v215
  %v232 = vmul.f32 %v104, %v216
  %v233 = vmul.f32 %v105, %v217
  %v234 = vmul.f32 %v106, %v218
  %v235 = vmul.f32 %v107, %v219
  %v236 = vmul.f32 %v108, %v220
  %v237 = vmul.f32 %v109, %v221
  %v238 = vmul.f32 %v110, %v222
  %v239 = vmul.f32 %v111, %v223
  %v240 = vmul.f32 %v112, %v224
  %v241 = vmul.f32 %v113, %v225
  %v242 = vmul.f32 %v114, %v226
  %v243 = vmul.f32 %v115, %v227
  %v244 = vmul.f32 %v116, %v228
  %v245 = vmul.f32 %v117, %v229
  %v246 = vmul.f32 %v118, %v230
  %v247 = vmul.f32 %v119, %v231
  %v249 = vlaneseq
  %v250 = vshrl.u32 %v249, 7
  %v251 = vsub.s32 0, %v250
  %v252 = vrot.slane %v36, %v251
  %v254 = vmul.f32 %v232, %v252
  %v255 = vmul.f32 %v233, %v252
  %v256 = vmul.f32 %v234, %v252
  %v257 = vmul.f32 %v235, %v252
  %v258 = vmul.f32 %v236, %v252
  %v259 = vmul.f32 %v237, %v252
  %v260 = vmul.f32 %v238, %v252
  %v261 = vmul.f32 %v239, %v252
  %v262 = vmul.f32 %v240, %v252
  %v263 = vmul.f32 %v241, %v252
  %v264 = vmul.f32 %v242, %v252
  %v265 = vmul.f32 %v243, %v252
  %v266 = vmul.f32 %v244, %v252
  %v267 = vmul.f32 %v245, %v252
  %v268 = vmul.f32 %v246, %v252
  %v269 = vmul.f32 %v247, %v252
  %v271 = vlaneseq
  %v272 = vshrl.u32 %v271, 7
  %v273 = vsub.s32 0, %v272
  %v274 = vrot.slane %v37, %v273
  %v276 = vadd.f32 %v254, %v274
  %v277 = vadd.f32 %v255, %v274
  %v278 = vadd.f32 %v256, %v274
  %v279 = vadd.f32 %v257, %v274
  %v280 = vadd.f32 %v258, %v274
  %v281 = vadd.f32 %v259, %v274
  %v282 = vadd.f32 %v260, %v274
  %v283 = vadd.f32 %v261, %v274
  %v284 = vadd.f32 %v262, %v274
  %v285 = vadd.f32 %v263, %v274
  %v286 = vadd.f32 %v264, %v274
  %v287 = vadd.f32 %v265, %v274
  %v288 = vadd.f32 %v266, %v274
  %v289 = vadd.f32 %v267, %v274
  %v290 = vadd.f32 %v268, %v274
  %v291 = vadd.f32 %v269, %v274
  %v292 = vld [vmem:[%s3] sm:$0xff]
  %v293 = vld [vmem:[%s3 + $0x8] sm:$0xff]
  %v294 = vld [vmem:[%s3 + $0x10] sm:$0xff]
  %v295 = vld [vmem:[%s3 + $0x18] sm:$0xff]
  %v296 = vld [vmem:[%s4] sm:$0x1]
  %v298 = vlaneseq
  %v299 = vshrl.u32 %v298, 7
  %v300 = vsub.s32 0, %v299
  %v301 = vrot.slane %v296, %v300
  %v304 = vsel %vm38, %v276, 0
  %v307 = vsel %vm38, %v277, 0
  %v310 = vsel %vm38, %v278, 0
  %v313 = vsel %vm38, %v279, 0
  %v316 = vsel %vm38, %v280, 0
  %v319 = vsel %vm38, %v281, 0
  %v322 = vsel %vm38, %v282, 0
  %v325 = vsel %vm38, %v283, 0
  %v328 = vsel %vm38, %v284, 0
  %v331 = vsel %vm38, %v285, 0
  %v334 = vsel %vm38, %v286, 0
  %v337 = vsel %vm38, %v287, 0
  %v340 = vsel %vm38, %v288, 0
  %v343 = vsel %vm38, %v289, 0
  %v346 = vsel %vm38, %v290, 0
  %v349 = vsel %vm38, %v291, 0
  %351 = vmatprep.subr.mxu0 0.0
  %352 = vmatpush1.msra.mxu0 0.0
  %353 = vmatprep.subr.mxu0 0.0
  %354 = vmatpush1.msra.mxu0 0.0
  %355 = vmatprep.subr.mxu0 0.0
  %356 = vmatpush1.msra.mxu0 0.0
  %357 = vmatprep.subr.mxu0 0.0
  %358 = vmatpush1.msra.mxu0 0.0
  %359 = vmatprep.subr.mxu0 0.0
  %360 = vmatpush1.msra.mxu0 0.0
  %361 = vmatprep.subr.mxu0 0.0
  %362 = vmatpush1.msra.mxu0 0.0
  %363 = vmatprep.subr.mxu0 0.0
  %364 = vmatpush1.msra.mxu0 0.0
  %365 = vmatprep.subr.mxu0 0.0
  %366 = vmatpush1.msra.mxu0 0.0
  %367 = vmatprep.subr.mxu0 0.0
  %368 = vmatpush1.msra.mxu0 0.0
  %369 = vmatprep.subr.mxu0 0.0
  %370 = vmatpush1.msra.mxu0 0.0
  %371 = vmatprep.subr.mxu0 0.0
  %372 = vmatpush1.msra.mxu0 0.0
  %373 = vmatprep.subr.mxu0 0.0
  %374 = vmatpush1.msra.mxu0 0.0
  %375 = vmatprep.subr.mxu0 0.0
  %376 = vmatpush1.msra.mxu0 %v295
  %377 = vmatprep.subr.mxu0 0.0
  %378 = vmatpush1.msra.mxu0 %v294
  %379 = vmatprep.subr.mxu0 0.0
  %380 = vmatpush1.msra.mxu0 %v293
  %381 = vmatprep.subr.mxu0 0.0
  %382 = vmatpush1.msra.mxu0 %v292
  %383 = vmatprep.subr.mxu0 0.0
  %384 = vmatpush2.msra.mxu0 0.0
  %385 = vmatprep.subr.mxu0 0.0
  %386 = vmatpush2.msra.mxu0 0.0
  %387 = vmatprep.subr.mxu0 0.0
  %388 = vmatpush2.msra.mxu0 0.0
  %389 = vmatprep.subr.mxu0 0.0
  %390 = vmatpush2.msra.mxu0 0.0
  %391 = vmatprep.subr.mxu0 0.0
  %392 = vmatpush2.msra.mxu0 0.0
  %393 = vmatprep.subr.mxu0 0.0
  %394 = vmatpush2.msra.mxu0 0.0
  %395 = vmatprep.subr.mxu0 0.0
  %396 = vmatpush2.msra.mxu0 0.0
  %397 = vmatprep.subr.mxu0 0.0
  %398 = vmatpush2.msra.mxu0 0.0
  %399 = vmatprep.subr.mxu0 0.0
  %400 = vmatpush2.msra.mxu0 0.0
  %401 = vmatprep.subr.mxu0 0.0
  %402 = vmatpush2.msra.mxu0 0.0
  %403 = vmatprep.subr.mxu0 0.0
  %404 = vmatpush2.msra.mxu0 0.0
  %405 = vmatprep.subr.mxu0 0.0
  %406 = vmatpush2.msra.mxu0 0.0
  %407 = vmatprep.subr.mxu0 0.0
  %408 = vmatpush2.msra.mxu0 0.0
  %409 = vmatprep.subr.mxu0 0.0
  %410 = vmatpush2.msra.mxu0 0.0
  %411 = vmatprep.subr.mxu0 0.0
  %412 = vmatpush2.msra.mxu0 0.0
  %413 = vmatprep.subr.mxu0 0.0
  %414 = vmatpush2.msra.mxu0 0.0
  %415 = vmatprep.mubr.f32.mxu0 0.0
  %416 = vmatmul.mubr.f32.gmra.mxu0 %v304
  %v417 = vpop.f32.mrf.mxu0
  %v418 = vadd.f32 %v301, %v417
  %v419 = vpop.f32.mrf.mxu0
  %420 = vmatprep.mubr.f32.mxu0 0.0
  %421 = vmatmul.mubr.f32.gmra.mxu0 %v307
  %v422 = vpop.f32.mrf.mxu0
  %v423 = vadd.f32 %v301, %v422
  %v424 = vpop.f32.mrf.mxu0
  %425 = vmatprep.mubr.f32.mxu0 0.0
  %426 = vmatmul.mubr.f32.gmra.mxu0 %v310
  %v427 = vpop.f32.mrf.mxu0
  %v428 = vadd.f32 %v301, %v427
  %v429 = vpop.f32.mrf.mxu0
  %430 = vmatprep.mubr.f32.mxu0 0.0
  %431 = vmatmul.mubr.f32.gmra.mxu0 %v313
  %v432 = vpop.f32.mrf.mxu0
  %v433 = vadd.f32 %v301, %v432
  %v434 = vpop.f32.mrf.mxu0
  %435 = vmatprep.mubr.f32.mxu0 0.0
  %436 = vmatmul.mubr.f32.gmra.mxu0 %v316
  %v437 = vpop.f32.mrf.mxu0
  %v438 = vadd.f32 %v301, %v437
  %v439 = vpop.f32.mrf.mxu0
  %440 = vmatprep.mubr.f32.mxu0 0.0
  %441 = vmatmul.mubr.f32.gmra.mxu0 %v319
  %v442 = vpop.f32.mrf.mxu0
  %v443 = vadd.f32 %v301, %v442
  %v444 = vpop.f32.mrf.mxu0
  %445 = vmatprep.mubr.f32.mxu0 0.0
  %446 = vmatmul.mubr.f32.gmra.mxu0 %v322
  %v447 = vpop.f32.mrf.mxu0
  %v448 = vadd.f32 %v301, %v447
  %v449 = vpop.f32.mrf.mxu0
  %450 = vmatprep.mubr.f32.mxu0 0.0
  %451 = vmatmul.mubr.f32.gmra.mxu0 %v325
  %v452 = vpop.f32.mrf.mxu0
  %v453 = vadd.f32 %v301, %v452
  %v454 = vpop.f32.mrf.mxu0
  %455 = vmatprep.mubr.f32.mxu0 0.0
  %456 = vmatmul.mubr.f32.gmra.mxu0 %v328
  %v457 = vpop.f32.mrf.mxu0
  %v458 = vadd.f32 %v301, %v457
  %v459 = vpop.f32.mrf.mxu0
  %460 = vmatprep.mubr.f32.mxu0 0.0
  %461 = vmatmul.mubr.f32.gmra.mxu0 %v331
  %v462 = vpop.f32.mrf.mxu0
  %v463 = vadd.f32 %v301, %v462
  %v464 = vpop.f32.mrf.mxu0
  %465 = vmatprep.mubr.f32.mxu0 0.0
  %466 = vmatmul.mubr.f32.gmra.mxu0 %v334
  %v467 = vpop.f32.mrf.mxu0
  %v468 = vadd.f32 %v301, %v467
  %v469 = vpop.f32.mrf.mxu0
  %470 = vmatprep.mubr.f32.mxu0 0.0
  %471 = vmatmul.mubr.f32.gmra.mxu0 %v337
  %v472 = vpop.f32.mrf.mxu0
  %v473 = vadd.f32 %v301, %v472
  %v474 = vpop.f32.mrf.mxu0
  %475 = vmatprep.mubr.f32.mxu0 0.0
  %476 = vmatmul.mubr.f32.gmra.mxu0 %v340
  %v477 = vpop.f32.mrf.mxu0
  %v478 = vadd.f32 %v301, %v477
  %v479 = vpop.f32.mrf.mxu0
  %480 = vmatprep.mubr.f32.mxu0 0.0
  %481 = vmatmul.mubr.f32.gmra.mxu0 %v343
  %v482 = vpop.f32.mrf.mxu0
  %v483 = vadd.f32 %v301, %v482
  %v484 = vpop.f32.mrf.mxu0
  %485 = vmatprep.mubr.f32.mxu0 0.0
  %486 = vmatmul.mubr.f32.gmra.mxu0 %v346
  %v487 = vpop.f32.mrf.mxu0
  %v488 = vadd.f32 %v301, %v487
  %v489 = vpop.f32.mrf.mxu0
  %490 = vmatprep.mubr.f32.mxu0 0.0
  %491 = vmatmul.mubr.f32.gmra.mxu0 %v349
  %v492 = vpop.f32.mrf.mxu0
  %v493 = vadd.f32 %v301, %v492
  %v494 = vpop.f32.mrf.mxu0
  %495 = vdwg.mxu0
  %vm496 = vcmask 785408
  %497 = vst.msk [vmem:[%s5] sm:$0xff] %vm496, %v418
  %498 = vst.msk [vmem:[%s5 + $0x8] sm:$0xff] %vm496, %v423
  %499 = vst.msk [vmem:[%s5 + $0x10] sm:$0xff] %vm496, %v428
  %500 = vst.msk [vmem:[%s5 + $0x18] sm:$0xff] %vm496, %v433
  %501 = vst.msk [vmem:[%s5 + $0x20] sm:$0xff] %vm496, %v438
  %502 = vst.msk [vmem:[%s5 + $0x28] sm:$0xff] %vm496, %v443
  %503 = vst.msk [vmem:[%s5 + $0x30] sm:$0xff] %vm496, %v448
  %504 = vst.msk [vmem:[%s5 + $0x38] sm:$0xff] %vm496, %v453
  %505 = vst.msk [vmem:[%s5 + $0x40] sm:$0xff] %vm496, %v458
  %506 = vst.msk [vmem:[%s5 + $0x48] sm:$0xff] %vm496, %v463
  %507 = vst.msk [vmem:[%s5 + $0x50] sm:$0xff] %vm496, %v468
  %508 = vst.msk [vmem:[%s5 + $0x58] sm:$0xff] %vm496, %v473
  %509 = vst.msk [vmem:[%s5 + $0x60] sm:$0xff] %vm496, %v478
  %510 = vst.msk [vmem:[%s5 + $0x68] sm:$0xff] %vm496, %v483
  %511 = vst.msk [vmem:[%s5 + $0x70] sm:$0xff] %vm496, %v488
  %512 = vst.msk [vmem:[%s5 + $0x78] sm:$0xff] %vm496, %v493
  // Predicated region
  $region22: #{tpu_custom_call.1} parent=0 // pred_check
    _
  $region23: #{tpu_custom_call.1} parent=0 // pred_check_branch
    %514 = sbr.rel (0) target = $region25
  $region24: #{tpu_custom_call.1} parent=0 // pred_region
    _
  $region25: #{tpu_custom_call.1} parent=0 // pred_fallthru
    _
  // Predicated region
  $region26: #{tpu_custom_call.1} parent=0 // pred_check
    _
  $region27: #{tpu_custom_call.1} parent=0 // pred_check_branch
    %516 = sbr.rel (0) target = $region29
  $region28: #{tpu_custom_call.1} parent=0 // pred_region
    _
  $region29: #{tpu_custom_call.1} parent=0 // pred_fallthru
    _

</llo_original>
